<compile_context>
chip_gen: v5e
topology: v5e:2x2
jax: 0.10.0
libtpu: 0.0.40
codegen_flags: <defaults>
</compile_context>

<pallas_src>
import jax
import jax.numpy as jnp
from jax.experimental import pallas as pl
from jax.experimental.pallas import tpu as pltpu

RELATIONS = ("no_relation", "per:employee_of", "org:founded_by",
             "per:origin", "org:members", "per:title", "org:parents",
             "per:spouse")  # 8 relations

_VMEM_PIPELINE_BUDGET = 10 << 20        # fits v5e's 16 MiB default scoped VMEM
_MIN_ELEMENTS_FOR_KERNEL = 1 << 15      # below this, XLA's fused GEMM wins


def _round_up(n: int, m: int) -> int:
    return (n + m - 1) // m * m


def _num_tensorcores_per_device() -> int:
    """Pallas-visible TensorCores per device: 2 on megacore parts (v4/v5p/v7x)."""
    try:
        kind = jax.devices()[0].device_kind.lower()
    except Exception:
        return 1
    if "v5e" in kind or "lite" in kind or "v6" in kind:
        return 1
    for tag in ("v7", "v5p", "v4"):
        if tag in kind:
            return 2
    return 1


def _choose_row_tile(M: int, H: int, x_itemsize: int, num_tc: int) -> int:
    """Row tile from a VMEM byte budget, not a fixed row count."""
    # Per-row VMEM: double-buffered x block + double-buffered (lane-padded) out block.
    per_row = 2 * H * x_itemsize + 2 * 128 * 4
    cap = (_VMEM_PIPELINE_BUDGET // per_row) // 8 * 8
    cap = max(8, min(cap, 4096))
    m_pad = _round_up(M, 8)
    if num_tc >= 2 and m_pad > 8:
        # Even number of grid steps so both TensorCores get equal work.
        n_steps = max(2, 2 * pl.cdiv(pl.cdiv(m_pad, cap), 2))
        return _round_up(pl.cdiv(m_pad, n_steps), 8)
    # Single TC: largest tile / fewest steps (per-step overhead only costs).
    return min(cap, m_pad)


def relation_head_kernel(x_ref, w_ref, b_ref, o_ref):
    # x_ref: (tm, H) native dtype   w_ref: (H, R) bf16
    # b_ref: (1, R)  f32            o_ref: (tm, R) f32
    x_bf = x_ref[...].astype(jnp.bfloat16)          # per-tile cast after DMA
    acc = jnp.dot(x_bf, w_ref[...],
                  preferred_element_type=jnp.float32)  # (tm, R), f32 MXU accumulate
    o_ref[...] = acc + b_ref[...]                      # f32 bias broadcast


def relation_head(x, w, b, *, force_pallas: bool = False):
    """x: (M, H), w: (H, R), b: (R,) -> logits (M, R) float32.

    Note: the matmul is performed with bf16-rounded operands (f32 accumulate);
    callers expecting f32-exact logits should be aware of the rounding.
    """
    M, H = x.shape
    Hw, R = w.shape
    assert H == Hw

    if not force_pallas and M * H < _MIN_ELEMENTS_FOR_KERNEL:
        # Tiny problem: pallas_call fixed overhead dominates; same numerics.
        x_bf = x.astype(jnp.bfloat16).astype(jnp.float32)
        w_bf = w.astype(jnp.bfloat16).astype(jnp.float32)
        return (x_bf @ w_bf + b.astype(jnp.float32)).astype(jnp.float32)

    w_bf = w.astype(jnp.bfloat16)                 # tiny (H*R); cast once
    b2 = b.astype(jnp.float32).reshape(1, R)

    num_tc = _num_tensorcores_per_device()
    tm = _choose_row_tile(M, H, x.dtype.itemsize, num_tc)
    n_steps = pl.cdiv(M, tm)

    bytes_accessed = (M * H * x.dtype.itemsize + H * R * 2 + R * 4 + M * R * 4)
    cost = pl.CostEstimate(flops=2 * M * H * R, transcendentals=0,
                           bytes_accessed=bytes_accessed)

    out = pl.pallas_call(
        relation_head_kernel,
        out_shape=jax.ShapeDtypeStruct((M, R), jnp.float32),
        grid_spec=pltpu.PrefetchScalarGridSpec(
            num_scalar_prefetch=0,
            grid=(n_steps,),
            in_specs=[
                pl.BlockSpec((tm, H), lambda i: (i, 0)),   # x row tile (native dtype)
                pl.BlockSpec((H, R), lambda i: (0, 0)),    # full weight (tiny)
                pl.BlockSpec((1, R), lambda i: (0, 0)),    # bias
            ],
            out_specs=pl.BlockSpec((tm, R), lambda i: (i, 0)),
        ),
        compiler_params=pltpu.CompilerParams(
            dimension_semantics=("parallel",)),
        cost_estimate=cost,
    )(x, w_bf, b2)

    return out


class AbstractModelPallas:
    """Minimal JAX mirror of AbstractModel's parameter/relation bookkeeping."""

    def __init__(self, relations, hidden=128, key=jax.random.PRNGKey(42)):
        self._relations = tuple(relations)
        self._dummy_param = jnp.empty((0,), jnp.float32)  # matches torch.empty(0)
        kw, kb = jax.random.split(key)
        r = len(self._relations)
        self.w = (jax.random.normal(kw, (hidden, r), jnp.float32)
                  * (1.0 / jnp.sqrt(hidden)))
        self.b = jax.random.normal(kb, (r,), jnp.float32) * 0.01

    @property
    def relations(self):
        return self._relations

    def forward(self, x, *, force_pallas: bool = False):
        # x: (batch, seq, hidden)
        B, S, H = x.shape
        logits = relation_head(x.reshape(B * S, H), self.w, self.b,
                               force_pallas=force_pallas)
        return logits.reshape(B, S, len(self._relations))


if __name__ == "__main__":
    batch, seq, hidden = 2, 256, 128   # M = 512 rows -> Pallas path is taken
    key = jax.random.PRNGKey(0)
    x = jax.random.normal(key, (batch, seq, hidden), jnp.float32)

    model = AbstractModelPallas(RELATIONS, hidden=hidden)
    logits = model.forward(x, force_pallas=True)
    logits = jax.block_until_ready(logits)

    # Correctness check vs plain JAX using the same bf16-rounded operands
    # (in-kernel bf16 cast + f32 MXU accumulate == f32 GEMM of bf16 values).
    x_bf = x.reshape(-1, hidden).astype(jnp.bfloat16).astype(jnp.float32)
    w_bf = model.w.astype(jnp.bfloat16).astype(jnp.float32)
    ref = (x_bf @ w_bf + model.b).reshape(batch, seq, -1)

    assert logits.shape == (batch, seq, len(RELATIONS))
    assert logits.dtype == jnp.float32
    assert jnp.allclose(logits, ref, atol=1e-3, rtol=1e-3)

    print("KERNEL_OK")
</pallas_src>

<mosaic_0001>
module attributes {stable_mosaic.version = 11 : i64} {
  func.func @relation_head_kernel(%arg0: i32, %arg1: memref<512x128xf32, #tpu.memory_space<vmem>>, %arg2: memref<128x8xbf16, #tpu.memory_space<vmem>>, %arg3: memref<1x8xf32, #tpu.memory_space<vmem>>, %arg4: memref<512x8xf32, #tpu.memory_space<vmem>>) attributes {dimension_semantics = [#tpu.dimension_semantics<parallel>], iteration_bounds = array<i64: 1>, scalar_prefetch = 0 : i64, scratch_operands = 0 : i64, tpu.core_type = #tpu.core_type<tc>, window_params = [{transform_indices = @transform_0, window_bounds = array<i64: 512, 128>}, {pipeline_mode = #tpu.pipeline_mode<synchronous>, transform_indices = @transform_1, window_bounds = array<i64: 128, 8>}, {pipeline_mode = #tpu.pipeline_mode<synchronous>, transform_indices = @transform_2, window_bounds = array<i64: 1, 8>}, {transform_indices = @transform_3, window_bounds = array<i64: 512, 8>}]} {
    %c0 = arith.constant 0 : index
    %c0_0 = arith.constant 0 : index
    %0 = vector.load %arg1[%c0, %c0_0] : memref<512x128xf32, #tpu.memory_space<vmem>>, vector<512x128xf32>
    %1 = arith.truncf %0 : vector<512x128xf32> to vector<512x128xbf16>
    %c0_1 = arith.constant 0 : index
    %c0_2 = arith.constant 0 : index
    %2 = vector.load %arg2[%c0_1, %c0_2] : memref<128x8xbf16, #tpu.memory_space<vmem>>, vector<128x8xbf16>
    %cst = arith.constant dense<0.000000e+00> : vector<512x8xf32>
    %3 = tpu.matmul %1, %2, %cst {dimension_numbers = #tpu.dot_dimension_numbers<[1], [0], [0], [1], [0, 0, 1, 1], [], []>} : vector<512x128xbf16>, vector<128x8xbf16>, vector<512x8xf32> -> vector<512x8xf32>
    %c0_3 = arith.constant 0 : index
    %c0_4 = arith.constant 0 : index
    %4 = vector.load %arg3[%c0_3, %c0_4] : memref<1x8xf32, #tpu.memory_space<vmem>>, vector<1x8xf32>
    %5 = vector.broadcast %4 : vector<1x8xf32> to vector<512x8xf32>
    %6 = arith.addf %3, %5 : vector<512x8xf32>
    %c0_5 = arith.constant 0 : index
    %c0_6 = arith.constant 0 : index
    %7 = vector.load %arg4[%c0_5, %c0_6] : memref<512x8xf32, #tpu.memory_space<vmem>>, vector<512x8xf32>
    tpu.vector_store %arg4[%c0_5, %c0_6], %6 {strides = array<i32>} : memref<512x8xf32, #tpu.memory_space<vmem>>, vector<512x8xf32>,
    return
  }
  func.func @transform_0(%arg0: i32) -> (i32, i32) {
    %c0_i32 = arith.constant 0 : i32
    %c0_i32_0 = arith.constant 0 : i32
    return %arg0, %c0_i32 : i32, i32
  }
  func.func @transform_1(%arg0: i32) -> (i32, i32) {
    %c0_i32 = arith.constant 0 : i32
    %c0_i32_0 = arith.constant 0 : i32
    %c0_i32_1 = arith.constant 0 : i32
    return %c0_i32, %c0_i32_0 : i32, i32
  }
  func.func @transform_2(%arg0: i32) -> (i32, i32) {
    %c0_i32 = arith.constant 0 : i32
    %c0_i32_0 = arith.constant 0 : i32
    %c0_i32_1 = arith.constant 0 : i32
    return %c0_i32, %c0_i32_0 : i32, i32
  }
  func.func @transform_3(%arg0: i32) -> (i32, i32) {
    %c0_i32 = arith.constant 0 : i32
    %c0_i32_0 = arith.constant 0 : i32
    return %arg0, %c0_i32 : i32, i32
  }
}

</mosaic_0001>

<llo_original>
// kernel: tpu_custom_call.1
$region0: #{tpu_custom_call.1}
  #allocation0 [shape = 'u32[]', space=smem, size = 0x4, offset = 0x4, fixed_abs, tag = 'smem constant byte address 0x4 - core index']
  #allocation1 [shape = 'u32[72,128]{1,0:T(1,128)}', space=vmem, size = 0x9000, scoped, tag = 'internal scratch']
  %s0 = inlined_call_operand.hbm [shape: f32[512,128], index: 0, kind: input, shape index: {}]
  %s1 = inlined_call_operand.vmem [shape: bf16[128,8], index: 1, kind: input, shape index: {}]
  %s2 = inlined_call_operand.vmem [shape: f32[1,8], index: 2, kind: input, shape index: {}]
  %s3 = inlined_call_operand.vmem [shape: f32[512,8], index: 3, kind: output, shape index: {}]
  %s4 = sld [smem:[#allocation0]]
  $region26: #{tpu_custom_call.1} parent=0
    _
  %s6 = ssub.s32 1, %s4
  %s7 = scalar_select 0, %s6, %s4
  $region1: #{tpu_custom_call.1} parent=0
    #allocation2 [shape = 'u8[262144]{0}', space=vmem, size = 0x40000, scoped, tag = 'input window, operand 0, single buffered']
    #allocation3 [shape = 's32[1]{0}', space=sflag, size = 0x4, scoped, tag = 'scoped memory for tpu_custom_call.1']
    %8 = vsyncpa [#allocation3], 0
    // Predicated region
    $region2: #{tpu_custom_call.1} parent=1 // pred_check
      _
    $region3: #{tpu_custom_call.1} parent=1 // pred_check_branch
      %10 = sbr.rel (0) target = $region5
    $region4: #{tpu_custom_call.1} parent=1 // pred_region
      %12 = vsyncadd [#allocation3], 0
      %s13 = sshll.u32 %s0, 4
      %s14 = int_to_ptr.hbm [resolvable:$true] %s13
      %s15 = sshll.u32 [#allocation2], 4
      %s16 = int_to_ptr.vmem [resolvable:$true] %s15
      %21 = dma.hbm_to_vmem [thread:$0]  %s14, 8192, %s16, [#allocation3], 128, 128, 8
    $region5: #{tpu_custom_call.1} parent=1 // pred_fallthru
      _
    // Predicated region
    $region6: #{tpu_custom_call.1} parent=1 // pred_check
      _
    $region7: #{tpu_custom_call.1} parent=1 // pred_check_branch
      %23 = sbr.rel (0) target = $region9
    $region8: #{tpu_custom_call.1} parent=1 // pred_region
      _
    $region9: #{tpu_custom_call.1} parent=1 // pred_fallthru
      _
    // Predicated region
    $region10: #{tpu_custom_call.1} parent=1 // pred_check
      _
    $region11: #{tpu_custom_call.1} parent=1 // pred_check_branch
      %25 = sbr.rel (0) target = $region13
    $region12: #{tpu_custom_call.1} parent=1 // pred_region
      _
    $region13: #{tpu_custom_call.1} parent=1 // pred_fallthru
      _
    // Predicated region
    $region14: #{tpu_custom_call.1} parent=1 // pred_check
      _
    $region15: #{tpu_custom_call.1} parent=1 // pred_check_branch
      %27 = sbr.rel (0) target = $region17
    $region16: #{tpu_custom_call.1} parent=1 // pred_region
      %29 = dma.done [#allocation3], 8192
    $region17: #{tpu_custom_call.1} parent=1 // pred_fallthru
      _
    %v30 = vld [vmem:[#allocation2] sm:$0xff]
    %v31 = vld [vmem:[#allocation2 + $0x8] sm:$0xff]
    %v32 = vld [vmem:[#allocation2 + $0x10] sm:$0xff]
    %v33 = vld [vmem:[#allocation2 + $0x18] sm:$0xff]
    %v34 = vld [vmem:[#allocation2 + $0x20] sm:$0xff]
    %v35 = vld [vmem:[#allocation2 + $0x28] sm:$0xff]
    %v36 = vld [vmem:[#allocation2 + $0x30] sm:$0xff]
    %v37 = vld [vmem:[#allocation2 + $0x38] sm:$0xff]
    %v38 = vld [vmem:[#allocation2 + $0x40] sm:$0xff]
    %v39 = vld [vmem:[#allocation2 + $0x48] sm:$0xff]
    %v40 = vld [vmem:[#allocation2 + $0x50] sm:$0xff]
    %v41 = vld [vmem:[#allocation2 + $0x58] sm:$0xff]
    %v42 = vld [vmem:[#allocation2 + $0x60] sm:$0xff]
    %v43 = vld [vmem:[#allocation2 + $0x68] sm:$0xff]
    %v44 = vld [vmem:[#allocation2 + $0x70] sm:$0xff]
    %v45 = vld [vmem:[#allocation2 + $0x78] sm:$0xff]
    %v46 = vld [vmem:[#allocation2 + $0x80] sm:$0xff]
    %v47 = vld [vmem:[#allocation2 + $0x88] sm:$0xff]
    %v48 = vld [vmem:[#allocation2 + $0x90] sm:$0xff]
    %v49 = vld [vmem:[#allocation2 + $0x98] sm:$0xff]
    %v50 = vld [vmem:[#allocation2 + $0xa0] sm:$0xff]
    %v51 = vld [vmem:[#allocation2 + $0xa8] sm:$0xff]
    %v52 = vld [vmem:[#allocation2 + $0xb0] sm:$0xff]
    %v53 = vld [vmem:[#allocation2 + $0xb8] sm:$0xff]
    %v54 = vld [vmem:[#allocation2 + $0xc0] sm:$0xff]
    %v55 = vld [vmem:[#allocation2 + $0xc8] sm:$0xff]
    %v56 = vld [vmem:[#allocation2 + $0xd0] sm:$0xff]
    %v57 = vld [vmem:[#allocation2 + $0xd8] sm:$0xff]
    %v58 = vld [vmem:[#allocation2 + $0xe0] sm:$0xff]
    %v59 = vld [vmem:[#allocation2 + $0xe8] sm:$0xff]
    %v60 = vld [vmem:[#allocation2 + $0xf0] sm:$0xff]
    %v61 = vld [vmem:[#allocation2 + $0xf8] sm:$0xff]
    %v62 = vld [vmem:[#allocation2 + $0x100] sm:$0xff]
    %v63 = vld [vmem:[#allocation2 + $0x108] sm:$0xff]
    %v64 = vld [vmem:[#allocation2 + $0x110] sm:$0xff]
    %v65 = vld [vmem:[#allocation2 + $0x118] sm:$0xff]
    %v66 = vld [vmem:[#allocation2 + $0x120] sm:$0xff]
    %v67 = vld [vmem:[#allocation2 + $0x128] sm:$0xff]
    %v68 = vld [vmem:[#allocation2 + $0x130] sm:$0xff]
    %v69 = vld [vmem:[#allocation2 + $0x138] sm:$0xff]
    %v70 = vld [vmem:[#allocation2 + $0x140] sm:$0xff]
    %v71 = vld [vmem:[#allocation2 + $0x148] sm:$0xff]
    %v72 = vld [vmem:[#allocation2 + $0x150] sm:$0xff]
    %v73 = vld [vmem:[#allocation2 + $0x158] sm:$0xff]
    %v74 = vld [vmem:[#allocation2 + $0x160] sm:$0xff]
    %v75 = vld [vmem:[#allocation2 + $0x168] sm:$0xff]
    %v76 = vld [vmem:[#allocation2 + $0x170] sm:$0xff]
    %v77 = vld [vmem:[#allocation2 + $0x178] sm:$0xff]
    %v78 = vld [vmem:[#allocation2 + $0x180] sm:$0xff]
    %v79 = vld [vmem:[#allocation2 + $0x188] sm:$0xff]
    %v80 = vld [vmem:[#allocation2 + $0x190] sm:$0xff]
    %v81 = vld [vmem:[#allocation2 + $0x198] sm:$0xff]
    %v82 = vld [vmem:[#allocation2 + $0x1a0] sm:$0xff]
    %v83 = vld [vmem:[#allocation2 + $0x1a8] sm:$0xff]
    %v84 = vld [vmem:[#allocation2 + $0x1b0] sm:$0xff]
    %v85 = vld [vmem:[#allocation2 + $0x1b8] sm:$0xff]
    %v86 = vld [vmem:[#allocation2 + $0x1c0] sm:$0xff]
    %v87 = vld [vmem:[#allocation2 + $0x1c8] sm:$0xff]
    %v88 = vld [vmem:[#allocation2 + $0x1d0] sm:$0xff]
    %v89 = vld [vmem:[#allocation2 + $0x1d8] sm:$0xff]
    %v90 = vld [vmem:[#allocation2 + $0x1e0] sm:$0xff]
    %v91 = vld [vmem:[#allocation2 + $0x1e8] sm:$0xff]
    %v92 = vld [vmem:[#allocation2 + $0x1f0] sm:$0xff]
    %v93 = vld [vmem:[#allocation2 + $0x1f8] sm:$0xff]
    %v94 = vpack.c.bf16 %v31, %v30
    %v95 = vpack.c.bf16 %v33, %v32
    %v96 = vpack.c.bf16 %v35, %v34
    %v97 = vpack.c.bf16 %v37, %v36
    %v98 = vpack.c.bf16 %v39, %v38
    %v99 = vpack.c.bf16 %v41, %v40
    %v100 = vpack.c.bf16 %v43, %v42
    %v101 = vpack.c.bf16 %v45, %v44
    %v102 = vpack.c.bf16 %v47, %v46
    %v103 = vpack.c.bf16 %v49, %v48
    %v104 = vpack.c.bf16 %v51, %v50
    %v105 = vpack.c.bf16 %v53, %v52
    %v106 = vpack.c.bf16 %v55, %v54
    %v107 = vpack.c.bf16 %v57, %v56
    %v108 = vpack.c.bf16 %v59, %v58
    %v109 = vpack.c.bf16 %v61, %v60
    %v110 = vpack.c.bf16 %v63, %v62
    %v111 = vpack.c.bf16 %v65, %v64
    %v112 = vpack.c.bf16 %v67, %v66
    %v113 = vpack.c.bf16 %v69, %v68
    %v114 = vpack.c.bf16 %v71, %v70
    %v115 = vpack.c.bf16 %v73, %v72
    %v116 = vpack.c.bf16 %v75, %v74
    %v117 = vpack.c.bf16 %v77, %v76
    %v118 = vpack.c.bf16 %v79, %v78
    %v119 = vpack.c.bf16 %v81, %v80
    %v120 = vpack.c.bf16 %v83, %v82
    %v121 = vpack.c.bf16 %v85, %v84
    %v122 = vpack.c.bf16 %v87, %v86
    %v123 = vpack.c.bf16 %v89, %v88
    %v124 = vpack.c.bf16 %v91, %v90
    %v125 = vpack.c.bf16 %v93, %v92
    %v126 = vld [vmem:[%s1] sm:$0xf]
    %v127 = vld [vmem:[%s1 + $0x4] sm:$0xf]
    %v128 = vld [vmem:[%s1 + $0x8] sm:$0xf]
    %v129 = vld [vmem:[%s1 + $0xc] sm:$0xf]
    %v130 = vld [vmem:[%s1 + $0x10] sm:$0xf]
    %v131 = vld [vmem:[%s1 + $0x14] sm:$0xf]
    %v132 = vld [vmem:[%s1 + $0x18] sm:$0xf]
    %v133 = vld [vmem:[%s1 + $0x1c] sm:$0xf]
    %v134 = vld [vmem:[%s1 + $0x20] sm:$0xf]
    %v135 = vld [vmem:[%s1 + $0x24] sm:$0xf]
    %v136 = vld [vmem:[%s1 + $0x28] sm:$0xf]
    %v137 = vld [vmem:[%s1 + $0x2c] sm:$0xf]
    %v138 = vld [vmem:[%s1 + $0x30] sm:$0xf]
    %v139 = vld [vmem:[%s1 + $0x34] sm:$0xf]
    %v140 = vld [vmem:[%s1 + $0x38] sm:$0xf]
    %v141 = vld [vmem:[%s1 + $0x3c] sm:$0xf]
    %v142 = vld [vmem:[%s2] sm:$0x1]
    %v144 = vperm.slane %v142, 0
    %v162 = vunpack.c.l.b16 %v126
    %v163 = vunpack.c.l.b16 %v127
    %v164 = vunpack.c.l.b16 %v128
    %v165 = vunpack.c.l.b16 %v129
    %v166 = vunpack.c.l.b16 %v130
    %v167 = vunpack.c.l.b16 %v131
    %v168 = vunpack.c.l.b16 %v132
    %v169 = vunpack.c.l.b16 %v133
    %v170 = vunpack.c.l.b16 %v134
    %v171 = vunpack.c.l.b16 %v135
    %v172 = vunpack.c.l.b16 %v136
    %v173 = vunpack.c.l.b16 %v137
    %v174 = vunpack.c.l.b16 %v138
    %v175 = vunpack.c.l.b16 %v139
    %v176 = vunpack.c.l.b16 %v140
    %v177 = vunpack.c.l.b16 %v141
    %v178 = vpack.c.b16 %v163, %v162
    %v179 = vpack.c.b16 %v165, %v164
    %v180 = vpack.c.b16 %v167, %v166
    %v181 = vpack.c.b16 %v169, %v168
    %v182 = vpack.c.b16 %v171, %v170
    %v183 = vpack.c.b16 %v173, %v172
    %v184 = vpack.c.b16 %v175, %v174
    %v185 = vpack.c.b16 %v177, %v176
    %194 = vmatpush.bf16.msra.mxu0 %v185
    %195 = vmatpush.bf16.msra.mxu0 %v184
    %196 = vmatpush.bf16.msra.mxu0 %v183
    %197 = vmatpush.bf16.msra.mxu0 %v182
    %198 = vmatpush.bf16.msra.mxu0 %v181
    %199 = vmatpush.bf16.msra.mxu0 %v180
    %200 = vmatpush.bf16.msra.mxu0 %v179
    %201 = vmatpush.bf16.msra.mxu0 %v178
    %202 = vmatmul.bf16.gmra.mxu0 %v94
    %v203 = vpop.f32.mrf.mxu0
    %v204 = vadd.f32 %v144, %v203
    %v205 = vpop.f32.mrf.mxu0
    %v206 = vadd.f32 %v144, %v205
    %207 = vmatmul.bf16.gmra.mxu0 %v95
    %v208 = vpop.f32.mrf.mxu0
    %v209 = vadd.f32 %v144, %v208
    %v210 = vpop.f32.mrf.mxu0
    %v211 = vadd.f32 %v144, %v210
    %212 = vmatmul.bf16.gmra.mxu0 %v96
    %v213 = vpop.f32.mrf.mxu0
    %v214 = vadd.f32 %v144, %v213
    %v215 = vpop.f32.mrf.mxu0
    %v216 = vadd.f32 %v144, %v215
    %217 = vmatmul.bf16.gmra.mxu0 %v97
    %v218 = vpop.f32.mrf.mxu0
    %v219 = vadd.f32 %v144, %v218
    %v220 = vpop.f32.mrf.mxu0
    %v221 = vadd.f32 %v144, %v220
    %222 = vmatmul.bf16.gmra.mxu0 %v98
    %v223 = vpop.f32.mrf.mxu0
    %v224 = vadd.f32 %v144, %v223
    %v225 = vpop.f32.mrf.mxu0
    %v226 = vadd.f32 %v144, %v225
    %227 = vmatmul.bf16.gmra.mxu0 %v99
    %v228 = vpop.f32.mrf.mxu0
    %v229 = vadd.f32 %v144, %v228
    %v230 = vpop.f32.mrf.mxu0
    %v231 = vadd.f32 %v144, %v230
    %232 = vmatmul.bf16.gmra.mxu0 %v100
    %v233 = vpop.f32.mrf.mxu0
    %v234 = vadd.f32 %v144, %v233
    %v235 = vpop.f32.mrf.mxu0
    %v236 = vadd.f32 %v144, %v235
    %237 = vmatmul.bf16.gmra.mxu0 %v101
    %v238 = vpop.f32.mrf.mxu0
    %v239 = vadd.f32 %v144, %v238
    %v240 = vpop.f32.mrf.mxu0
    %v241 = vadd.f32 %v144, %v240
    %242 = vmatmul.bf16.gmra.mxu0 %v102
    %v243 = vpop.f32.mrf.mxu0
    %v244 = vadd.f32 %v144, %v243
    %v245 = vpop.f32.mrf.mxu0
    %v246 = vadd.f32 %v144, %v245
    %247 = vmatmul.bf16.gmra.mxu0 %v103
    %v248 = vpop.f32.mrf.mxu0
    %v249 = vadd.f32 %v144, %v248
    %v250 = vpop.f32.mrf.mxu0
    %v251 = vadd.f32 %v144, %v250
    %252 = vmatmul.bf16.gmra.mxu0 %v104
    %v253 = vpop.f32.mrf.mxu0
    %v254 = vadd.f32 %v144, %v253
    %v255 = vpop.f32.mrf.mxu0
    %v256 = vadd.f32 %v144, %v255
    %257 = vmatmul.bf16.gmra.mxu0 %v105
    %v258 = vpop.f32.mrf.mxu0
    %v259 = vadd.f32 %v144, %v258
    %v260 = vpop.f32.mrf.mxu0
    %v261 = vadd.f32 %v144, %v260
    %262 = vmatmul.bf16.gmra.mxu0 %v106
    %v263 = vpop.f32.mrf.mxu0
    %v264 = vadd.f32 %v144, %v263
    %v265 = vpop.f32.mrf.mxu0
    %v266 = vadd.f32 %v144, %v265
    %267 = vmatmul.bf16.gmra.mxu0 %v107
    %v268 = vpop.f32.mrf.mxu0
    %v269 = vadd.f32 %v144, %v268
    %v270 = vpop.f32.mrf.mxu0
    %v271 = vadd.f32 %v144, %v270
    %272 = vmatmul.bf16.gmra.mxu0 %v108
    %v273 = vpop.f32.mrf.mxu0
    %v274 = vadd.f32 %v144, %v273
    %v275 = vpop.f32.mrf.mxu0
    %v276 = vadd.f32 %v144, %v275
    %277 = vmatmul.bf16.gmra.mxu0 %v109
    %v278 = vpop.f32.mrf.mxu0
    %v279 = vadd.f32 %v144, %v278
    %v280 = vpop.f32.mrf.mxu0
    %v281 = vadd.f32 %v144, %v280
    %282 = vmatmul.bf16.gmra.mxu0 %v110
    %v283 = vpop.f32.mrf.mxu0
    %v284 = vadd.f32 %v144, %v283
    %v285 = vpop.f32.mrf.mxu0
    %v286 = vadd.f32 %v144, %v285
    %287 = vmatmul.bf16.gmra.mxu0 %v111
    %v288 = vpop.f32.mrf.mxu0
    %v289 = vadd.f32 %v144, %v288
    %v290 = vpop.f32.mrf.mxu0
    %v291 = vadd.f32 %v144, %v290
    %292 = vmatmul.bf16.gmra.mxu0 %v112
    %v293 = vpop.f32.mrf.mxu0
    %v294 = vadd.f32 %v144, %v293
    %v295 = vpop.f32.mrf.mxu0
    %v296 = vadd.f32 %v144, %v295
    %297 = vmatmul.bf16.gmra.mxu0 %v113
    %v298 = vpop.f32.mrf.mxu0
    %v299 = vadd.f32 %v144, %v298
    %v300 = vpop.f32.mrf.mxu0
    %v301 = vadd.f32 %v144, %v300
    %302 = vmatmul.bf16.gmra.mxu0 %v114
    %v303 = vpop.f32.mrf.mxu0
    %v304 = vadd.f32 %v144, %v303
    %v305 = vpop.f32.mrf.mxu0
    %v306 = vadd.f32 %v144, %v305
    %307 = vmatmul.bf16.gmra.mxu0 %v115
    %v308 = vpop.f32.mrf.mxu0
    %v309 = vadd.f32 %v144, %v308
    %v310 = vpop.f32.mrf.mxu0
    %v311 = vadd.f32 %v144, %v310
    %312 = vmatmul.bf16.gmra.mxu0 %v116
    %v313 = vpop.f32.mrf.mxu0
    %v314 = vadd.f32 %v144, %v313
    %v315 = vpop.f32.mrf.mxu0
    %v316 = vadd.f32 %v144, %v315
    %317 = vmatmul.bf16.gmra.mxu0 %v117
    %v318 = vpop.f32.mrf.mxu0
    %v319 = vadd.f32 %v144, %v318
    %v320 = vpop.f32.mrf.mxu0
    %v321 = vadd.f32 %v144, %v320
    %322 = vmatmul.bf16.gmra.mxu0 %v118
    %v323 = vpop.f32.mrf.mxu0
    %v324 = vadd.f32 %v144, %v323
    %v325 = vpop.f32.mrf.mxu0
    %v326 = vadd.f32 %v144, %v325
    %327 = vmatmul.bf16.gmra.mxu0 %v119
    %v328 = vpop.f32.mrf.mxu0
    %v329 = vadd.f32 %v144, %v328
    %v330 = vpop.f32.mrf.mxu0
    %v331 = vadd.f32 %v144, %v330
    %332 = vmatmul.bf16.gmra.mxu0 %v120
    %v333 = vpop.f32.mrf.mxu0
    %v334 = vadd.f32 %v144, %v333
    %v335 = vpop.f32.mrf.mxu0
    %v336 = vadd.f32 %v144, %v335
    %337 = vmatmul.bf16.gmra.mxu0 %v121
    %v338 = vpop.f32.mrf.mxu0
    %v339 = vadd.f32 %v144, %v338
    %v340 = vpop.f32.mrf.mxu0
    %v341 = vadd.f32 %v144, %v340
    %342 = vmatmul.bf16.gmra.mxu0 %v122
    %v343 = vpop.f32.mrf.mxu0
    %v344 = vadd.f32 %v144, %v343
    %v345 = vpop.f32.mrf.mxu0
    %v346 = vadd.f32 %v144, %v345
    %347 = vmatmul.bf16.gmra.mxu0 %v123
    %v348 = vpop.f32.mrf.mxu0
    %v349 = vadd.f32 %v144, %v348
    %v350 = vpop.f32.mrf.mxu0
    %v351 = vadd.f32 %v144, %v350
    %352 = vmatmul.bf16.gmra.mxu0 %v124
    %v353 = vpop.f32.mrf.mxu0
    %v354 = vadd.f32 %v144, %v353
    %v355 = vpop.f32.mrf.mxu0
    %v356 = vadd.f32 %v144, %v355
    %357 = vmatmul.bf16.gmra.mxu0 %v125
    %v358 = vpop.f32.mrf.mxu0
    %v359 = vadd.f32 %v144, %v358
    %v360 = vpop.f32.mrf.mxu0
    %v361 = vadd.f32 %v144, %v360
    %362 = vdwg.mxu0
    %vm363 = vcmask 64512
    %364 = vst.msk [vmem:[%s3] sm:$0xff] %vm363, %v204
    %365 = vst.msk [vmem:[%s3 + $0x8] sm:$0xff] %vm363, %v206
    %366 = vst.msk [vmem:[%s3 + $0x10] sm:$0xff] %vm363, %v209
    %367 = vst.msk [vmem:[%s3 + $0x18] sm:$0xff] %vm363, %v211
    %368 = vst.msk [vmem:[%s3 + $0x20] sm:$0xff] %vm363, %v214
    %369 = vst.msk [vmem:[%s3 + $0x28] sm:$0xff] %vm363, %v216
    %370 = vst.msk [vmem:[%s3 + $0x30] sm:$0xff] %vm363, %v219
    %371 = vst.msk [vmem:[%s3 + $0x38] sm:$0xff] %vm363, %v221
    %372 = vst.msk [vmem:[%s3 + $0x40] sm:$0xff] %vm363, %v224
    %373 = vst.msk [vmem:[%s3 + $0x48] sm:$0xff] %vm363, %v226
    %374 = vst.msk [vmem:[%s3 + $0x50] sm:$0xff] %vm363, %v229
    %375 = vst.msk [vmem:[%s3 + $0x58] sm:$0xff] %vm363, %v231
    %376 = vst.msk [vmem:[%s3 + $0x60] sm:$0xff] %vm363, %v234
    %377 = vst.msk [vmem:[%s3 + $0x68] sm:$0xff] %vm363, %v236
    %378 = vst.msk [vmem:[%s3 + $0x70] sm:$0xff] %vm363, %v239
    %379 = vst.msk [vmem:[%s3 + $0x78] sm:$0xff] %vm363, %v241
    %380 = vst.msk [vmem:[%s3 + $0x80] sm:$0xff] %vm363, %v244
    %381 = vst.msk [vmem:[%s3 + $0x88] sm:$0xff] %vm363, %v246
    %382 = vst.msk [vmem:[%s3 + $0x90] sm:$0xff] %vm363, %v249
    %383 = vst.msk [vmem:[%s3 + $0x98] sm:$0xff] %vm363, %v251
    %384 = vst.msk [vmem:[%s3 + $0xa0] sm:$0xff] %vm363, %v254
    %385 = vst.msk [vmem:[%s3 + $0xa8] sm:$0xff] %vm363, %v256
    %386 = vst.msk [vmem:[%s3 + $0xb0] sm:$0xff] %vm363, %v259
    %387 = vst.msk [vmem:[%s3 + $0xb8] sm:$0xff] %vm363, %v261
    %388 = vst.msk [vmem:[%s3 + $0xc0] sm:$0xff] %vm363, %v264
    %389 = vst.msk [vmem:[%s3 + $0xc8] sm:$0xff] %vm363, %v266
    %390 = vst.msk [vmem:[%s3 + $0xd0] sm:$0xff] %vm363, %v269
    %391 = vst.msk [vmem:[%s3 + $0xd8] sm:$0xff] %vm363, %v271
    %392 = vst.msk [vmem:[%s3 + $0xe0] sm:$0xff] %vm363, %v274
    %393 = vst.msk [vmem:[%s3 + $0xe8] sm:$0xff] %vm363, %v276
    %394 = vst.msk [vmem:[%s3 + $0xf0] sm:$0xff] %vm363, %v279
    %395 = vst.msk [vmem:[%s3 + $0xf8] sm:$0xff] %vm363, %v281
    %396 = vst.msk [vmem:[%s3 + $0x100] sm:$0xff] %vm363, %v284
    %397 = vst.msk [vmem:[%s3 + $0x108] sm:$0xff] %vm363, %v286
    %398 = vst.msk [vmem:[%s3 + $0x110] sm:$0xff] %vm363, %v289
    %399 = vst.msk [vmem:[%s3 + $0x118] sm:$0xff] %vm363, %v291
    %400 = vst.msk [vmem:[%s3 + $0x120] sm:$0xff] %vm363, %v294
    %401 = vst.msk [vmem:[%s3 + $0x128] sm:$0xff] %vm363, %v296
    %402 = vst.msk [vmem:[%s3 + $0x130] sm:$0xff] %vm363, %v299
    %403 = vst.msk [vmem:[%s3 + $0x138] sm:$0xff] %vm363, %v301
    %404 = vst.msk [vmem:[%s3 + $0x140] sm:$0xff] %vm363, %v304
    %405 = vst.msk [vmem:[%s3 + $0x148] sm:$0xff] %vm363, %v306
    %406 = vst.msk [vmem:[%s3 + $0x150] sm:$0xff] %vm363, %v309
    %407 = vst.msk [vmem:[%s3 + $0x158] sm:$0xff] %vm363, %v311
    %408 = vst.msk [vmem:[%s3 + $0x160] sm:$0xff] %vm363, %v314
    %409 = vst.msk [vmem:[%s3 + $0x168] sm:$0xff] %vm363, %v316
    %410 = vst.msk [vmem:[%s3 + $0x170] sm:$0xff] %vm363, %v319
    %411 = vst.msk [vmem:[%s3 + $0x178] sm:$0xff] %vm363, %v321
    %412 = vst.msk [vmem:[%s3 + $0x180] sm:$0xff] %vm363, %v324
    %413 = vst.msk [vmem:[%s3 + $0x188] sm:$0xff] %vm363, %v326
    %414 = vst.msk [vmem:[%s3 + $0x190] sm:$0xff] %vm363, %v329
    %415 = vst.msk [vmem:[%s3 + $0x198] sm:$0xff] %vm363, %v331
    %416 = vst.msk [vmem:[%s3 + $0x1a0] sm:$0xff] %vm363, %v334
    %417 = vst.msk [vmem:[%s3 + $0x1a8] sm:$0xff] %vm363, %v336
    %418 = vst.msk [vmem:[%s3 + $0x1b0] sm:$0xff] %vm363, %v339
    %419 = vst.msk [vmem:[%s3 + $0x1b8] sm:$0xff] %vm363, %v341
    %420 = vst.msk [vmem:[%s3 + $0x1c0] sm:$0xff] %vm363, %v344
    %421 = vst.msk [vmem:[%s3 + $0x1c8] sm:$0xff] %vm363, %v346
    %422 = vst.msk [vmem:[%s3 + $0x1d0] sm:$0xff] %vm363, %v349
    %423 = vst.msk [vmem:[%s3 + $0x1d8] sm:$0xff] %vm363, %v351
    %424 = vst.msk [vmem:[%s3 + $0x1e0] sm:$0xff] %vm363, %v354
    %425 = vst.msk [vmem:[%s3 + $0x1e8] sm:$0xff] %vm363, %v356
    %426 = vst.msk [vmem:[%s3 + $0x1f0] sm:$0xff] %vm363, %v359
    %427 = vst.msk [vmem:[%s3 + $0x1f8] sm:$0xff] %vm363, %v361
    // Predicated region
    $region18: #{tpu_custom_call.1} parent=1 // pred_check
      _
    $region19: #{tpu_custom_call.1} parent=1 // pred_check_branch
      %429 = sbr.rel (0) target = $region21
    $region20: #{tpu_custom_call.1} parent=1 // pred_region
      _
    $region21: #{tpu_custom_call.1} parent=1 // pred_fallthru
      _
    // Predicated region
    $region22: #{tpu_custom_call.1} parent=1 // pred_check
      _
    $region23: #{tpu_custom_call.1} parent=1 // pred_check_branch
      %431 = sbr.rel (0) target = $region25
    $region24: #{tpu_custom_call.1} parent=1 // pred_region
      _
    $region25: #{tpu_custom_call.1} parent=1 // pred_fallthru
      _
    %432 = vsyncpa [#allocation3], 1

</llo_original>
